<compile_context>
chip_gen: v6e
topology: v6e:2x2x1
jax: 0.10.0
libtpu: 0.0.40
codegen_flags: <defaults>
</compile_context>

<pallas_src>
import jax
import jax.numpy as jnp
from jax.experimental import pallas as pl
from jax.experimental.pallas import tpu as pltpu

LANES = 128
MAX_TILE_ROWS = 2048    # (2048,128) f32 block: 1 MiB in + 2 MiB out; ~6 MiB double-buffered


def _round_up(a: int, m: int) -> int:
    return -(-a // m) * m


def gmlpe_kernel(coeff_ref, x_ref, y0_ref, y1_ref):
    # coeff_ref: SMEM f32[4] = [a0, a1, c0, c1]
    # x_ref:     VMEM f32[tile_rows, 128]  (batch elements, lane-dense)
    # y0_ref:    VMEM f32[tile_rows, 128]  (channel 0: plain affine)
    # y1_ref:    VMEM f32[tile_rows, 128]  (channel 1: softplus(affine))
    x = x_ref[...]
    a0 = coeff_ref[0]
    a1 = coeff_ref[1]
    c0 = coeff_ref[2]
    c1 = coeff_ref[3]

    y0_ref[...] = a0 * x + c0

    z = a1 * x + c1
    # Softplus with PyTorch semantics (beta=1, threshold=20 -> identity above 20).
    y1_ref[...] = jnp.where(z > 20.0, z, jnp.log1p(jnp.exp(jnp.minimum(z, 20.0))))


def _fold_affine(w1, b1, w2, b2, w3, b3):
    """Collapse the activation-free Linear stack into [a0, a1, c0, c1]."""
    w_eff = (w1 @ w2) @ w3                        # (1, 2)
    b_eff = (b1 @ w2) @ w3 + b2 @ w3 + b3         # (1, 2)
    return jnp.concatenate([w_eff.reshape(-1), b_eff.reshape(-1)]).astype(jnp.float32)


def _gmlpe_planes_call(coeffs, x_lanes):
    """Run the kernel on a lane-dense (rows, 128) f32 batch; returns two planes."""
    rows = x_lanes.shape[0]

    # Keep >= 2 grid steps whenever possible (v7x megacore sharding), capped at
    # MAX_TILE_ROWS so per-step overhead stays amortized on large batches.
    tile_rows = min(MAX_TILE_ROWS, max(8, _round_up(pl.cdiv(rows, 2), 8)))
    grid = (pl.cdiv(rows, tile_rows),)            # partial tail block is clipped by Pallas

    spec = pl.BlockSpec((tile_rows, LANES), lambda i: (i, 0))
    return pl.pallas_call(
        gmlpe_kernel,
        out_shape=(jax.ShapeDtypeStruct((rows, LANES), jnp.float32),
                   jax.ShapeDtypeStruct((rows, LANES), jnp.float32)),
        grid=grid,
        in_specs=[
            pl.BlockSpec(memory_space=pltpu.MemorySpace.SMEM),   # coeffs (4,) scalars
            spec,                                                # x tile
        ],
        out_specs=(spec, spec),
        compiler_params=pltpu.CompilerParams(
            dimension_semantics=("parallel",)),
    )(coeffs, x_lanes)


@jax.jit
def gmlpe_forward_planes(x_lanes, w1, b1, w2, b2, w3, b3):
    """Fast path: x already lane-dense (rows, 128) f32 -> (y0, y1) planes, same layout.

    Use this when the consumer can keep the lane-dense layout (no extra HBM passes)."""
    coeffs = _fold_affine(w1, b1, w2, b2, w3, b3)
    return _gmlpe_planes_call(coeffs, x_lanes)


@jax.jit
def gmlpe_forward(x, w1, b1, w2, b2, w3, b3):
    """Drop-in PyTorch contract: x (N, 1) f32 -> (N, 2) f32."""
    N = x.shape[0]
    coeffs = _fold_affine(w1, b1, w2, b2, w3, b3)

    # Pad only to the lane (128) / sublane (8) granule -- NOT to a tile multiple.
    rows = _round_up(max(1, pl.cdiv(N, LANES)), 8)
    x_lanes = jnp.pad(x.reshape(-1), (0, rows * LANES - N)).reshape(rows, LANES)

    y0, y1 = _gmlpe_planes_call(coeffs, x_lanes)

    # Repack to (N, 2) for API parity with the PyTorch module (this interleave is
    # an extra HBM pass; prefer gmlpe_forward_planes when the layout can be kept).
    return jnp.stack([y0.reshape(-1)[:N], y1.reshape(-1)[:N]], axis=-1)


def init_params(key):
    """Deterministic init mimicking PyTorch nn.Linear default (uniform +/- 1/sqrt(fan_in)).

    Weights are stored as (in_features, out_features) so forward is x @ W + b."""
    ks = jax.random.split(key, 6)

    def lin(kw, kb, fan_in, fan_out):
        bound = 1.0 / (fan_in ** 0.5)
        w = jax.random.uniform(kw, (fan_in, fan_out), jnp.float32, -bound, bound)
        b = jax.random.uniform(kb, (1, fan_out), jnp.float32, -bound, bound)
        return w, b

    w1, b1 = lin(ks[0], ks[1], 1, 16)    # self.lin
    w2, b2 = lin(ks[2], ks[3], 16, 16)   # self.mid
    w3, b3 = lin(ks[4], ks[5], 16, 2)    # self.layer_end
    return w1, b1, w2, b2, w3, b3


def reference_forward(x, w1, b1, w2, b2, w3, b3):
    """Un-collapsed reference (three chained matmuls), validates the algebraic fold."""
    y = x @ w1 + b1
    y = y @ w2 + b2
    y = y @ w3 + b3
    sp = jnp.where(y > 20.0, y, jnp.log1p(jnp.exp(jnp.minimum(y, 20.0))))
    return y.at[:, 1].set(sp[:, 1])


if __name__ == "__main__":
    key = jax.random.PRNGKey(0)
    k_param, k_x = jax.random.split(key)

    params = init_params(k_param)
    N = 257                               # exercises lane padding / partial tail tile
    x = jax.random.normal(k_x, (N, 1), jnp.float32)

    out = jax.block_until_ready(gmlpe_forward(x, *params))
    ref = reference_forward(x, *params)

    assert out.shape == (N, 2)
    assert jnp.allclose(out, ref, atol=1e-4, rtol=1e-4), (out, ref)

    # Also exercise the lane-dense fast path and check it against the repacked output.
    rows = _round_up(max(1, pl.cdiv(N, LANES)), 8)
    x_lanes = jnp.pad(x.reshape(-1), (0, rows * LANES - N)).reshape(rows, LANES)
    y0_p, y1_p = jax.block_until_ready(gmlpe_forward_planes(x_lanes, *params))
    assert jnp.allclose(y0_p.reshape(-1)[:N], out[:, 0], atol=1e-5, rtol=1e-5)
    assert jnp.allclose(y1_p.reshape(-1)[:N], out[:, 1], atol=1e-5, rtol=1e-5)

    print("KERNEL_OK")
</pallas_src>

<mosaic_0001>
module attributes {stable_mosaic.version = 11 : i64} {
  func.func @gmlpe_kernel(%arg0: i32, %arg1: memref<4xf32, #tpu.memory_space<smem>>, %arg2: memref<8x128xf32, #tpu.memory_space<vmem>>, %arg3: memref<8x128xf32, #tpu.memory_space<vmem>>, %arg4: memref<8x128xf32, #tpu.memory_space<vmem>>) attributes {dimension_semantics = [#tpu.dimension_semantics<parallel>], iteration_bounds = array<i64: 1>, scalar_prefetch = 0 : i64, scratch_operands = 0 : i64, tpu.core_type = #tpu.core_type<tc>, window_params = [{transform_indices = @transform_0, window_bounds = array<i64: 4>}, {transform_indices = @transform_1, window_bounds = array<i64: 8, 128>}, {transform_indices = @transform_2, window_bounds = array<i64: 8, 128>}, {transform_indices = @transform_3, window_bounds = array<i64: 8, 128>}]} {
    %c0 = arith.constant 0 : index
    %c0_0 = arith.constant 0 : index
    %0 = vector.load %arg2[%c0, %c0_0] : memref<8x128xf32, #tpu.memory_space<vmem>>, vector<8x128xf32>
    %c0_1 = arith.constant 0 : index
    %1 = memref.load %arg1[%c0_1] : memref<4xf32, #tpu.memory_space<smem>>
    %c1 = arith.constant 1 : index
    %2 = memref.load %arg1[%c1] : memref<4xf32, #tpu.memory_space<smem>>
    %c2 = arith.constant 2 : index
    %3 = memref.load %arg1[%c2] : memref<4xf32, #tpu.memory_space<smem>>
    %c3 = arith.constant 3 : index
    %4 = memref.load %arg1[%c3] : memref<4xf32, #tpu.memory_space<smem>>
    %5 = vector.broadcast %1 : f32 to vector<8x128xf32>
    %6 = arith.mulf %5, %0 : vector<8x128xf32>
    %7 = vector.broadcast %3 : f32 to vector<8x128xf32>
    %8 = arith.addf %6, %7 : vector<8x128xf32>
    %c0_2 = arith.constant 0 : index
    %c0_3 = arith.constant 0 : index
    %9 = vector.load %arg3[%c0_2, %c0_3] : memref<8x128xf32, #tpu.memory_space<vmem>>, vector<8x128xf32>
    tpu.vector_store %arg3[%c0_2, %c0_3], %8 {strides = array<i32>} : memref<8x128xf32, #tpu.memory_space<vmem>>, vector<8x128xf32>,
    %10 = vector.broadcast %2 : f32 to vector<8x128xf32>
    %11 = arith.mulf %10, %0 : vector<8x128xf32>
    %12 = vector.broadcast %4 : f32 to vector<8x128xf32>
    %13 = arith.addf %11, %12 : vector<8x128xf32>
    %cst = arith.constant 2.000000e+01 : f32
    %14 = vector.broadcast %cst : f32 to vector<8x128xf32>
    %15 = arith.cmpf ogt, %13, %14 : vector<8x128xf32>
    %cst_4 = arith.constant 2.000000e+01 : f32
    %16 = vector.broadcast %cst_4 : f32 to vector<8x128xf32>
    %17 = arith.minimumf %13, %16 : vector<8x128xf32>
    %18 = math.exp %17 : vector<8x128xf32>
    %19 = math.log1p %18 : vector<8x128xf32>
    %20 = arith.select %15, %13, %19 : vector<8x128xi1>, vector<8x128xf32>
    %c0_5 = arith.constant 0 : index
    %c0_6 = arith.constant 0 : index
    %21 = vector.load %arg4[%c0_5, %c0_6] : memref<8x128xf32, #tpu.memory_space<vmem>>, vector<8x128xf32>
    tpu.vector_store %arg4[%c0_5, %c0_6], %20 {strides = array<i32>} : memref<8x128xf32, #tpu.memory_space<vmem>>, vector<8x128xf32>,
    return
  }
  func.func @transform_0(%arg0: i32) -> i32 {
    %c0_i32 = arith.constant 0 : i32
    %c0_i32_0 = arith.constant 0 : i32
    return %c0_i32 : i32
  }
  func.func @transform_1(%arg0: i32) -> (i32, i32) {
    %c0_i32 = arith.constant 0 : i32
    %c0_i32_0 = arith.constant 0 : i32
    return %arg0, %c0_i32 : i32, i32
  }
  func.func @transform_2(%arg0: i32) -> (i32, i32) {
    %c0_i32 = arith.constant 0 : i32
    %c0_i32_0 = arith.constant 0 : i32
    return %arg0, %c0_i32 : i32, i32
  }
  func.func @transform_3(%arg0: i32) -> (i32, i32) {
    %c0_i32 = arith.constant 0 : i32
    %c0_i32_0 = arith.constant 0 : i32
    return %arg0, %c0_i32 : i32, i32
  }
}

</mosaic_0001>

<llo_original>
// kernel: gmlpe_forward.1
$region0: #{gmlpe_forward.1}
  #allocation0 [shape = 'u32[]', space=smem, size = 0x4, offset = 0x4, fixed_abs, tag = 'smem constant byte address 0x4 - core index']
  #allocation1 [shape = 'u32[144,128]{1,0:T(1,128)}', space=vmem, size = 0x12000, scoped, tag = 'internal scratch']
  %s0 = inlined_call_operand.vmem [shape: f32[4], index: 0, kind: input, shape index: {}]
  %s1 = inlined_call_operand.vmem [shape: f32[8,128], index: 1, kind: input, shape index: {}]
  %s2 = inlined_call_operand.vmem [shape: f32[8,128], index: 2, kind: output, shape index: {0}]
  %s3 = inlined_call_operand.vmem [shape: f32[8,128], index: 3, kind: output, shape index: {1}]
  %4 = xla_tuple %s2, %s3
  %s5 = sld [smem:[#allocation0]]
  $region30: #{gmlpe_forward.1} parent=0
    _
  %s7 = ssub.s32 1, %s5
  %s8 = scalar_select 0, %s7, %s5
  $region1: #{gmlpe_forward.1} parent=0
    #allocation2 [shape = 'u8[512]{0}', space=smem, size = 0x200, scoped, tag = 'input window, operand 0, single buffered']
    #allocation3 [shape = 's32[1]{0}', space=sflag, size = 0x4, scoped, tag = 'scoped memory for gmlpe_forward.1']
    %9 = vsyncpa [#allocation3], 0
    // Predicated region
    $region2: #{gmlpe_forward.1} parent=1 // pred_check
      _
    $region3: #{gmlpe_forward.1} parent=1 // pred_check_branch
      %11 = sbr.rel (0) target = $region5
    $region4: #{gmlpe_forward.1} parent=1 // pred_region
      %s13 = ssub.s32 16, 16
      %14 = vsyncadd [#allocation3], %s13
      %s16 = sshll.u32 %s0, 4
      %s17 = int_to_ptr.vmem [resolvable:$true] %s16
      %19 = dma.vmem_to_smem %s17, 16, [#allocation2], [#allocation3]
    $region5: #{gmlpe_forward.1} parent=1 // pred_fallthru
      _
    // Predicated region
    $region6: #{gmlpe_forward.1} parent=1 // pred_check
      _
    $region7: #{gmlpe_forward.1} parent=1 // pred_check_branch
      %21 = sbr.rel (0) target = $region9
    $region8: #{gmlpe_forward.1} parent=1 // pred_region
      _
    $region9: #{gmlpe_forward.1} parent=1 // pred_fallthru
      _
    // Predicated region
    $region10: #{gmlpe_forward.1} parent=1 // pred_check
      _
    $region11: #{gmlpe_forward.1} parent=1 // pred_check_branch
      %23 = sbr.rel (0) target = $region13
    $region12: #{gmlpe_forward.1} parent=1 // pred_region
      %24 = dma.done [#allocation3], 16
    $region13: #{gmlpe_forward.1} parent=1 // pred_fallthru
      _
    %25 = sfence
    %v26 = vld [vmem:[%s1] sm:$0xff]
    %s27 = sld [smem:[#allocation2]]
    %s28 = sld [smem:[#allocation2 + $0x1]]
    %s29 = sld [smem:[#allocation2 + $0x2]]
    %s30 = sld [smem:[#allocation2 + $0x3]]
    %v31 = vstv %s27
    %v32 = vmul.f32 %v31, %v26
    %v33 = vstv %s29
    %v34 = vadd.f32 %v32, %v33
    %35 = vst [vmem:[%s2] sm:$0xff] %v34
    %v36 = vstv %s28
    %v37 = vmul.f32 %v36, %v26
    %v38 = vstv %s30
    %v39 = vadd.f32 %v37, %v38
    %vm40 = vcmp.gt.f32.partialorder %v39, 20.0
    %v41 = vmin.f32 %v39, 20.0
    %v42 = vmul.f32 %v41, 1.442695
    %v43 = vpow.pop %v42
    %v44 = vadd.f32 %v43, 1.0
    %v45 = vlog2.pop %v44
    %v46 = vmul.f32 %v45, 0.6931472
    %v47 = vmul.f32 -0.5, %v43
    %v48 = vadd.f32 %v47, 1.0
    %v49 = vmul.f32 %v48, %v43
    %v50 = vand.u32 2147483647, %v43
    %vm51 = vcmp.lt.f32.partialorder %v50, 0.0004427343
    %v52 = vsel %vm51, %v49, %v46
    %v53 = vsel %vm40, %v39, %v52
    %54 = vst [vmem:[%s3] sm:$0xff] %v53
    // Predicated region
    $region14: #{gmlpe_forward.1} parent=1 // pred_check
      _
    $region15: #{gmlpe_forward.1} parent=1 // pred_check_branch
      %56 = sbr.rel (0) target = $region17
    $region16: #{gmlpe_forward.1} parent=1 // pred_region
      _
    $region17: #{gmlpe_forward.1} parent=1 // pred_fallthru
      _
    // Predicated region
    $region18: #{gmlpe_forward.1} parent=1 // pred_check
      _
    $region19: #{gmlpe_forward.1} parent=1 // pred_check_branch
      %58 = sbr.rel (0) target = $region21
    $region20: #{gmlpe_forward.1} parent=1 // pred_region
      _
    $region21: #{gmlpe_forward.1} parent=1 // pred_fallthru
      _
    // Predicated region
    $region22: #{gmlpe_forward.1} parent=1 // pred_check
      _
    $region23: #{gmlpe_forward.1} parent=1 // pred_check_branch
      %60 = sbr.rel (0) target = $region25
    $region24: #{gmlpe_forward.1} parent=1 // pred_region
      _
    $region25: #{gmlpe_forward.1} parent=1 // pred_fallthru
      _
    // Predicated region
    $region26: #{gmlpe_forward.1} parent=1 // pred_check
      _
    $region27: #{gmlpe_forward.1} parent=1 // pred_check_branch
      %62 = sbr.rel (0) target = $region29
    $region28: #{gmlpe_forward.1} parent=1 // pred_region
      _
    $region29: #{gmlpe_forward.1} parent=1 // pred_fallthru
      _
    %63 = vsyncpa [#allocation3], 1

</llo_original>
